<compile_context>
chip_gen: v6e
topology: v6e:2x2x1
jax: 0.10.0
libtpu: 0.0.40
codegen_flags: <defaults>
</compile_context>

<pallas_src>
import functools

import jax
import jax.numpy as jnp
from jax.experimental import pallas as pl
from jax.experimental.pallas import tpu as pltpu


# --------------------------------------------------------------------------- #
# Kernel
# --------------------------------------------------------------------------- #
def _make_kernel(act_dtype, exact_gelu):
    act_dtype = jnp.dtype(act_dtype)

    def kernel(x_ref, w1_ref, b1_ref, w2_ref, b2_ref, o_ref):
        # x_ref: (tm, D) tile of rows; weights/biases are VMEM-resident.
        x = x_ref[...]

        # fn(x): Linear -> GELU -> Linear.  MXU operands in the weight dtype
        # (bf16 by default), f32 accumulation.
        h = jnp.dot(x.astype(w1_ref.dtype), w1_ref[...],
                    preferred_element_type=jnp.float32)
        h = h.astype(act_dtype) + b1_ref[...].astype(act_dtype)
        # tanh-GELU routes the transcendental to the EUP slot; exact erf only
        # when strict torch.nn.GELU parity is requested.
        h = jax.nn.gelu(h, approximate=not exact_gelu)

        y = jnp.dot(h.astype(w2_ref.dtype), w2_ref[...],
                    preferred_element_type=jnp.float32)
        y = y + b2_ref[...].astype(jnp.float32)

        # Residual: fn(x) + x in f32, single final cast; D is a multiple of
        # 128 in practice so the store is lane-dense (unmasked vst).
        o_ref[...] = (y + x.astype(jnp.float32)).astype(o_ref.dtype)

    return kernel


# --------------------------------------------------------------------------- #
# One-time capability probe for single-buffered (Buffered(1)) weight specs.
# --------------------------------------------------------------------------- #
@functools.lru_cache(maxsize=None)
def _single_buffer_supported() -> bool:
    if not hasattr(pl, "Buffered"):
        return False

    def _probe_kernel(x_ref, w_ref, o_ref):
        o_ref[...] = x_ref[...] + w_ref[...]

    try:
        f = pl.pallas_call(
            _probe_kernel,
            out_shape=jax.ShapeDtypeStruct((8, 128), jnp.float32),
            grid_spec=pltpu.PrefetchScalarGridSpec(
                num_scalar_prefetch=0,
                grid=(1,),
                in_specs=[
                    pl.BlockSpec((8, 128), lambda i: (0, 0)),
                    pl.BlockSpec((8, 128), lambda i: (0, 0),
                                 pipeline_mode=pl.Buffered(1)),
                ],
                out_specs=pl.BlockSpec((8, 128), lambda i: (0, 0)),
            ),
        )
        jax.block_until_ready(
            f(jnp.zeros((8, 128), jnp.float32), jnp.zeros((8, 128), jnp.float32)))
        return True
    except Exception:
        # Probe-only fallback: default (double-buffered) weight specs.
        return False


# --------------------------------------------------------------------------- #
# Jitted pallas_call wrapper (reshapes fuse; static config keyed on shapes).
# --------------------------------------------------------------------------- #
@functools.partial(
    jax.jit,
    static_argnames=("tm", "act_dtype", "exact_gelu", "single_buffer",
                     "vmem_limit"))
def _residual_ffn_call(x, w1, b1, w2, b2, *, tm, act_dtype, exact_gelu,
                       single_buffer, vmem_limit):
    B, S, D = x.shape
    H = w1.shape[1]
    M = B * S

    x2 = x.reshape(M, D)
    b1_2 = b1.reshape(1, H)
    b2_2 = b2.reshape(1, D)

    if single_buffer:
        # Constant index_map -> never re-DMAed; single buffer saves VMEM.
        def w_spec(shape):
            return pl.BlockSpec(shape, lambda i: (0, 0),
                                pipeline_mode=pl.Buffered(1))
    else:
        def w_spec(shape):
            return pl.BlockSpec(shape, lambda i: (0, 0))

    wbytes = jnp.dtype(w1.dtype).itemsize
    cost = pl.CostEstimate(
        flops=4 * M * D * H,
        transcendentals=M * H,
        bytes_accessed=(2 * M * D * jnp.dtype(x.dtype).itemsize
                        + 2 * D * H * wbytes
                        + (H + D) * jnp.dtype(b1.dtype).itemsize),
    )

    out = pl.pallas_call(
        _make_kernel(act_dtype, exact_gelu),
        out_shape=jax.ShapeDtypeStruct((M, D), x.dtype),
        grid_spec=pltpu.PrefetchScalarGridSpec(
            num_scalar_prefetch=0,
            grid=(pl.cdiv(M, tm),),
            in_specs=[
                pl.BlockSpec((tm, D), lambda i: (i, 0)),   # x rows (pipelined)
                w_spec((D, H)),                            # w1 (resident)
                w_spec((1, H)),                            # b1
                w_spec((H, D)),                            # w2
                w_spec((1, D)),                            # b2
            ],
            out_specs=pl.BlockSpec((tm, D), lambda i: (i, 0)),
        ),
        compiler_params=pltpu.CompilerParams(
            dimension_semantics=("parallel",),
            vmem_limit_bytes=vmem_limit,
        ),
        cost_estimate=cost,
    )(x2, w1, b1_2, w2, b2_2)

    return out.reshape(B, S, D)


# --------------------------------------------------------------------------- #
# Public wrapper: static config (tile size, dtypes, VMEM budget).
# --------------------------------------------------------------------------- #
def _round_up(v, m):
    return ((v + m - 1) // m) * m


def _vmem_capacity_bytes():
    try:
        return int(pltpu.get_tpu_info().vmem_capacity_bytes)
    except Exception:
        return 64 * 1024 * 1024  # conservative (v7x-sized) fallback


def residual_ffn(x, w1, b1, w2, b2, *, tm=None, matmul_dtype=jnp.bfloat16,
                 activation_dtype=None, exact_gelu=False):
    """Fused Residual(FeedForward): gelu(x @ w1 + b1) @ w2 + b2 + x.

    matmul_dtype: MXU operand dtype (default bf16; accumulation is f32).
    activation_dtype: dtype of the bias-add/GELU on the (tm, H) intermediate;
        defaults to bf16 when matmul_dtype is bf16 (pass jnp.float32 on v5e,
        which has no bf16 VPU/EUP), else f32.
    exact_gelu: use exact erf GELU (torch.nn.GELU default) instead of tanh.
    """
    B, S, D = x.shape
    H = w1.shape[1]
    M = B * S

    w_dtype = jnp.dtype(matmul_dtype) if matmul_dtype is not None else jnp.dtype(x.dtype)
    if activation_dtype is not None:
        act_dtype = jnp.dtype(activation_dtype)
    else:
        act_dtype = (jnp.dtype(jnp.bfloat16)
                     if w_dtype == jnp.dtype(jnp.bfloat16) else jnp.dtype(jnp.float32))

    # Cast weights to the matmul dtype; store them in this dtype at init so
    # these are no-ops on the hot path.
    w1 = w1.astype(w_dtype)
    w2 = w2.astype(w_dtype)
    b1 = b1.astype(jnp.float32)
    b2 = b2.astype(jnp.float32)

    vmem_cap = _vmem_capacity_bytes()
    usable = min(int(0.80 * vmem_cap), 100 * 1024 * 1024)
    single_buffer = _single_buffer_supported()
    w_buf = 1 if single_buffer else 2

    # Generation-aware row tile: 512 when VMEM is roomy (v5e/v6e), 256 on v7x;
    # clamped to the (8-aligned) row count for small inputs.
    if tm is None:
        tm = 512 if vmem_cap >= 96 * 1024 * 1024 else 256
    tm = max(8, _round_up(min(tm, _round_up(M, 8)), 8))

    def vmem_estimate(t):
        wsz = w_dtype.itemsize
        asz = act_dtype.itemsize
        xsz = jnp.dtype(x.dtype).itemsize
        return (w_buf * (2 * D * H * wsz + (H + D) * 4)     # resident weights/biases
                + 2 * t * D * xsz + 2 * t * D * xsz          # x / out double buffers
                + t * H * (4 + asz)                           # (tm, H) intermediates
                + 2 * t * D * 4)                              # f32 y + residual

    # Shrink the row tile (not the dtype) until the budget fits the chip.
    while tm > 8 and int(1.5 * vmem_estimate(tm)) > usable:
        tm = max(8, _round_up(tm // 2, 8))
    vmem_limit = int(min(max(32 * 1024 * 1024, int(1.5 * vmem_estimate(tm))), usable))

    return _residual_ffn_call(
        x, w1, b1, w2, b2,
        tm=int(tm),
        act_dtype=str(act_dtype),
        exact_gelu=bool(exact_gelu),
        single_buffer=bool(single_buffer),
        vmem_limit=vmem_limit,
    )


def residual_ffn_ref(x, w1, b1, w2, b2, *, exact_gelu=True):
    h = jax.nn.gelu(x @ w1 + b1, approximate=not exact_gelu)
    return h @ w2 + b2 + x


# --------------------------------------------------------------------------- #
# Self-test
# --------------------------------------------------------------------------- #
if __name__ == "__main__":
    # Small transformer-block shapes; D/H multiples of 128 -> lane-dense tiles.
    B, S, D, H = 2, 8, 128, 256

    key = jax.random.PRNGKey(0)
    kx, kw1, kb1, kw2, kb2 = jax.random.split(key, 5)

    x = jax.random.normal(kx, (B, S, D), dtype=jnp.float32)
    w1 = jax.random.normal(kw1, (D, H), dtype=jnp.float32) * (1.0 / D ** 0.5)
    b1 = jax.random.normal(kb1, (H,), dtype=jnp.float32) * 0.01
    w2 = jax.random.normal(kw2, (H, D), dtype=jnp.float32) * (1.0 / H ** 0.5)
    b2 = jax.random.normal(kb2, (D,), dtype=jnp.float32) * 0.01

    # "Init-time" weight cast for the default fast path (bf16 MXU operands).
    w1_bf16 = w1.astype(jnp.bfloat16)
    w2_bf16 = w2.astype(jnp.bfloat16)

    # 1) Default fast path: bf16 operands, bf16 tanh-GELU, f32 accum/residual.
    out_fast = jax.block_until_ready(residual_ffn(x, w1_bf16, b1, w2_bf16, b2))
    ref_fast = residual_ffn_ref(x, w1, b1, w2, b2, exact_gelu=False)
    assert out_fast.shape == x.shape and out_fast.dtype == x.dtype
    assert jnp.allclose(out_fast, ref_fast, atol=5e-2, rtol=5e-2), \
        float(jnp.max(jnp.abs(out_fast - ref_fast)))

    # 2) Exact-parity path (f32 operands, exact erf GELU) vs f32 reference.
    out_exact = jax.block_until_ready(
        residual_ffn(x, w1, b1, w2, b2, matmul_dtype=jnp.float32, exact_gelu=True))
    ref_exact = residual_ffn_ref(x, w1, b1, w2, b2, exact_gelu=True)
    assert out_exact.shape == x.shape and out_exact.dtype == x.dtype
    assert jnp.allclose(out_exact, ref_exact, atol=2e-5, rtol=2e-5), \
        float(jnp.max(jnp.abs(out_exact - ref_exact)))

    print("KERNEL_OK")
</pallas_src>

<mosaic_0001>
module attributes {stable_mosaic.version = 11 : i64} {
  func.func @_probe_kernel(%arg0: i32, %arg1: memref<8x128xf32, #tpu.memory_space<vmem>>, %arg2: memref<8x128xf32, #tpu.memory_space<vmem>>, %arg3: memref<8x128xf32, #tpu.memory_space<vmem>>) attributes {dimension_semantics = [#tpu.dimension_semantics<arbitrary>], iteration_bounds = array<i64: 1>, scalar_prefetch = 0 : i64, scratch_operands = 0 : i64, tpu.core_type = #tpu.core_type<tc>, window_params = [{pipeline_mode = #tpu.pipeline_mode<synchronous>, transform_indices = @transform_0, window_bounds = array<i64: 8, 128>}, {pipeline_mode = #tpu.pipeline_mode<synchronous>, transform_indices = @transform_1, window_bounds = array<i64: 8, 128>}, {pipeline_mode = #tpu.pipeline_mode<synchronous>, transform_indices = @transform_2, window_bounds = array<i64: 8, 128>}]} {
    %c0 = arith.constant 0 : index
    %c0_0 = arith.constant 0 : index
    %0 = vector.load %arg1[%c0, %c0_0] : memref<8x128xf32, #tpu.memory_space<vmem>>, vector<8x128xf32>
    %c0_1 = arith.constant 0 : index
    %c0_2 = arith.constant 0 : index
    %1 = vector.load %arg2[%c0_1, %c0_2] : memref<8x128xf32, #tpu.memory_space<vmem>>, vector<8x128xf32>
    %2 = arith.addf %0, %1 : vector<8x128xf32>
    %c0_3 = arith.constant 0 : index
    %c0_4 = arith.constant 0 : index
    %3 = vector.load %arg3[%c0_3, %c0_4] : memref<8x128xf32, #tpu.memory_space<vmem>>, vector<8x128xf32>
    tpu.vector_store %arg3[%c0_3, %c0_4], %2 {strides = array<i32>} : memref<8x128xf32, #tpu.memory_space<vmem>>, vector<8x128xf32>,
    return
  }
  func.func @transform_0(%arg0: i32) -> (i32, i32) {
    %c0_i32 = arith.constant 0 : i32
    %c0_i32_0 = arith.constant 0 : i32
    %c0_i32_1 = arith.constant 0 : i32
    return %c0_i32, %c0_i32_0 : i32, i32
  }
  func.func @transform_1(%arg0: i32) -> (i32, i32) {
    %c0_i32 = arith.constant 0 : i32
    %c0_i32_0 = arith.constant 0 : i32
    %c0_i32_1 = arith.constant 0 : i32
    return %c0_i32, %c0_i32_0 : i32, i32
  }
  func.func @transform_2(%arg0: i32) -> (i32, i32) {
    %c0_i32 = arith.constant 0 : i32
    %c0_i32_0 = arith.constant 0 : i32
    %c0_i32_1 = arith.constant 0 : i32
    return %c0_i32, %c0_i32_0 : i32, i32
  }
}

module attributes {stable_mosaic.version = 11 : i64} {
  func.func @kernel(%arg0: i32, %arg1: memref<16x128xf32, #tpu.memory_space<vmem>>, %arg2: memref<128x256xbf16, #tpu.memory_space<vmem>>, %arg3: memref<1x256xf32, #tpu.memory_space<vmem>>, %arg4: memref<256x128xbf16, #tpu.memory_space<vmem>>, %arg5: memref<1x128xf32, #tpu.memory_space<vmem>>, %arg6: memref<16x128xf32, #tpu.memory_space<vmem>>) attributes {dimension_semantics = [#tpu.dimension_semantics<parallel>], iteration_bounds = array<i64: 1>, scalar_prefetch = 0 : i64, scratch_operands = 0 : i64, tpu.core_type = #tpu.core_type<tc>, window_params = [{transform_indices = @transform_0, window_bounds = array<i64: 16, 128>}, {pipeline_mode = #tpu.pipeline_mode<synchronous>, transform_indices = @transform_1, window_bounds = array<i64: 128, 256>}, {pipeline_mode = #tpu.pipeline_mode<synchronous>, transform_indices = @transform_2, window_bounds = array<i64: 1, 256>}, {pipeline_mode = #tpu.pipeline_mode<synchronous>, transform_indices = @transform_3, window_bounds = array<i64: 256, 128>}, {pipeline_mode = #tpu.pipeline_mode<synchronous>, transform_indices = @transform_4, window_bounds = array<i64: 1, 128>}, {transform_indices = @transform_5, window_bounds = array<i64: 16, 128>}]} {
    %c0 = arith.constant 0 : index
    %c0_0 = arith.constant 0 : index
    %0 = vector.load %arg1[%c0, %c0_0] : memref<16x128xf32, #tpu.memory_space<vmem>>, vector<16x128xf32>
    %1 = arith.truncf %0 : vector<16x128xf32> to vector<16x128xbf16>
    %c0_1 = arith.constant 0 : index
    %c0_2 = arith.constant 0 : index
    %2 = vector.load %arg2[%c0_1, %c0_2] : memref<128x256xbf16, #tpu.memory_space<vmem>>, vector<128x256xbf16>
    %cst = arith.constant dense<0.000000e+00> : vector<16x256xf32>
    %3 = tpu.matmul %1, %2, %cst {dimension_numbers = #tpu.dot_dimension_numbers<[1], [0], [0], [1], [0, 0, 1, 1], [], []>} : vector<16x128xbf16>, vector<128x256xbf16>, vector<16x256xf32> -> vector<16x256xf32>
    %4 = arith.truncf %3 : vector<16x256xf32> to vector<16x256xbf16>
    %c0_3 = arith.constant 0 : index
    %c0_4 = arith.constant 0 : index
    %5 = vector.load %arg3[%c0_3, %c0_4] : memref<1x256xf32, #tpu.memory_space<vmem>>, vector<1x256xf32>
    %6 = arith.truncf %5 : vector<1x256xf32> to vector<1x256xbf16>
    %7 = vector.broadcast %6 : vector<1x256xbf16> to vector<16x256xbf16>
    %8 = arith.addf %4, %7 : vector<16x256xbf16>
    %9 = arith.mulf %8, %8 : vector<16x256xbf16>
    %10 = arith.mulf %8, %9 : vector<16x256xbf16>
    %cst_5 = arith.constant 4.467770e-02 : bf16
    %11 = vector.broadcast %cst_5 : bf16 to vector<16x256xbf16>
    %12 = arith.mulf %11, %10 : vector<16x256xbf16>
    %13 = arith.addf %8, %12 : vector<16x256xbf16>
    %cst_6 = arith.constant 7.968750e-01 : bf16
    %14 = vector.broadcast %cst_6 : bf16 to vector<16x256xbf16>
    %15 = arith.mulf %14, %13 : vector<16x256xbf16>
    %16 = math.tanh %15 : vector<16x256xbf16>
    %cst_7 = arith.constant 1.000000e+00 : bf16
    %17 = vector.broadcast %cst_7 : bf16 to vector<16x256xbf16>
    %18 = arith.addf %17, %16 : vector<16x256xbf16>
    %cst_8 = arith.constant 5.000000e-01 : bf16
    %19 = vector.broadcast %cst_8 : bf16 to vector<16x256xbf16>
    %20 = arith.mulf %19, %18 : vector<16x256xbf16>
    %21 = arith.mulf %8, %20 : vector<16x256xbf16>
    %c0_9 = arith.constant 0 : index
    %c0_10 = arith.constant 0 : index
    %22 = vector.load %arg4[%c0_9, %c0_10] : memref<256x128xbf16, #tpu.memory_space<vmem>>, vector<256x128xbf16>
    %cst_11 = arith.constant dense<0.000000e+00> : vector<16x128xf32>
    %23 = tpu.matmul %21, %22, %cst_11 {dimension_numbers = #tpu.dot_dimension_numbers<[1], [0], [0], [1], [0, 0, 1, 1], [], []>} : vector<16x256xbf16>, vector<256x128xbf16>, vector<16x128xf32> -> vector<16x128xf32>
    %c0_12 = arith.constant 0 : index
    %c0_13 = arith.constant 0 : index
    %24 = vector.load %arg5[%c0_12, %c0_13] : memref<1x128xf32, #tpu.memory_space<vmem>>, vector<1x128xf32>
    %25 = vector.broadcast %24 : vector<1x128xf32> to vector<16x128xf32>
    %26 = arith.addf %23, %25 : vector<16x128xf32>
    %27 = arith.addf %26, %0 : vector<16x128xf32>
    %c0_14 = arith.constant 0 : index
    %c0_15 = arith.constant 0 : index
    %28 = vector.load %arg6[%c0_14, %c0_15] : memref<16x128xf32, #tpu.memory_space<vmem>>, vector<16x128xf32>
    tpu.vector_store %arg6[%c0_14, %c0_15], %27 {strides = array<i32>} : memref<16x128xf32, #tpu.memory_space<vmem>>, vector<16x128xf32>,
    return
  }
  func.func @transform_0(%arg0: i32) -> (i32, i32) {
    %c0_i32 = arith.constant 0 : i32
    %c0_i32_0 = arith.constant 0 : i32
    return %arg0, %c0_i32 : i32, i32
  }
  func.func @transform_1(%arg0: i32) -> (i32, i32) {
    %c0_i32 = arith.constant 0 : i32
    %c0_i32_0 = arith.constant 0 : i32
    %c0_i32_1 = arith.constant 0 : i32
    return %c0_i32, %c0_i32_0 : i32, i32
  }
  func.func @transform_2(%arg0: i32) -> (i32, i32) {
    %c0_i32 = arith.constant 0 : i32
    %c0_i32_0 = arith.constant 0 : i32
    %c0_i32_1 = arith.constant 0 : i32
    return %c0_i32, %c0_i32_0 : i32, i32
  }
  func.func @transform_3(%arg0: i32) -> (i32, i32) {
    %c0_i32 = arith.constant 0 : i32
    %c0_i32_0 = arith.constant 0 : i32
    %c0_i32_1 = arith.constant 0 : i32
    return %c0_i32, %c0_i32_0 : i32, i32
  }
  func.func @transform_4(%arg0: i32) -> (i32, i32) {
    %c0_i32 = arith.constant 0 : i32
    %c0_i32_0 = arith.constant 0 : i32
    %c0_i32_1 = arith.constant 0 : i32
    return %c0_i32, %c0_i32_0 : i32, i32
  }
  func.func @transform_5(%arg0: i32) -> (i32, i32) {
    %c0_i32 = arith.constant 0 : i32
    %c0_i32_0 = arith.constant 0 : i32
    return %arg0, %c0_i32 : i32, i32
  }
}

</mosaic_0001>

<llo_original>
// kernel: tpu_custom_call.1
$region0: #{tpu_custom_call.1}
  #allocation0 [shape = 'u32[]', space=smem, size = 0x4, offset = 0x4, fixed_abs, tag = 'smem constant byte address 0x4 - core index']
  #allocation1 [shape = 'u32[144,128]{1,0:T(1,128)}', space=vmem, size = 0x12000, scoped, tag = 'internal scratch']
  %s0 = inlined_call_operand.hbm [shape: f32[8,128], index: 0, kind: input, shape index: {}]
  %s1 = inlined_call_operand.hbm [shape: f32[8,128], index: 1, kind: input, shape index: {}]
  %s2 = inlined_call_operand.hbm [shape: f32[8,128], index: 2, kind: output, shape index: {}]
  %s3 = sld [smem:[#allocation0]]
  $region26: #{tpu_custom_call.1} parent=0
    _
  %s5 = ssub.s32 1, %s3
  %s6 = scalar_select 0, %s5, %s3
  $region1: #{tpu_custom_call.1} parent=0
    #allocation2 [shape = 'u8[4096]{0}', space=vmem, size = 0x1000, scoped, tag = 'input window, operand 0, single buffered']
    #allocation3 [shape = 's32[1]{0}', space=sflag, size = 0x4, scoped, tag = 'scoped memory for tpu_custom_call.1']
    #allocation4 [shape = 's32[1]{0}', space=sflag, size = 0x4, scoped, tag = 'scoped memory for tpu_custom_call.1']
    #allocation5 [shape = 'u8[4096]{0}', space=vmem, size = 0x1000, scoped, tag = 'input window, operand 1, single buffered']
    #allocation6 [shape = 's32[1]{0}', space=sflag, size = 0x4, scoped, tag = 'scoped memory for tpu_custom_call.1']
    #allocation7 [shape = 'u8[4096]{0}', space=vmem, size = 0x1000, scoped, tag = 'output window, operand 0, single buffered']
    %7 = vsyncpa [#allocation3], 0
    %8 = vsyncpa [#allocation6], 0
    %9 = vsyncpa [#allocation4], 0
    // Predicated region
    $region2: #{tpu_custom_call.1} parent=1 // pred_check
      _
    $region3: #{tpu_custom_call.1} parent=1 // pred_check_branch
      %11 = sbr.rel (0) target = $region5
    $region4: #{tpu_custom_call.1} parent=1 // pred_region
      %s13 = ssub.s32 128, 128
      %14 = vsyncadd [#allocation3], %s13
      %s16 = sshll.u32 [#allocation2], 4
      %s17 = int_to_ptr.vmem [resolvable:$true] %s16
      %19 = dma.hbm_to_vmem [thread:$0]  %s0, 128, %s17, [#allocation3]
    $region5: #{tpu_custom_call.1} parent=1 // pred_fallthru
      _
    // Predicated region
    $region6: #{tpu_custom_call.1} parent=1 // pred_check
      _
    $region7: #{tpu_custom_call.1} parent=1 // pred_check_branch
      %21 = sbr.rel (0) target = $region9
    $region8: #{tpu_custom_call.1} parent=1 // pred_region
      %s23 = ssub.s32 128, 128
      %24 = vsyncadd [#allocation6], %s23
      %s26 = sshll.u32 [#allocation5], 4
      %s27 = int_to_ptr.vmem [resolvable:$true] %s26
      %29 = dma.hbm_to_vmem [thread:$0]  %s1, 128, %s27, [#allocation6]
    $region9: #{tpu_custom_call.1} parent=1 // pred_fallthru
      _
    // Predicated region
    $region10: #{tpu_custom_call.1} parent=1 // pred_check
      _
    $region11: #{tpu_custom_call.1} parent=1 // pred_check_branch
      %31 = sbr.rel (0) target = $region13
    $region12: #{tpu_custom_call.1} parent=1 // pred_region
      %32 = dma.done [#allocation3], 128
    $region13: #{tpu_custom_call.1} parent=1 // pred_fallthru
      _
    // Predicated region
    $region14: #{tpu_custom_call.1} parent=1 // pred_check
      _
    $region15: #{tpu_custom_call.1} parent=1 // pred_check_branch
      %34 = sbr.rel (0) target = $region17
    $region16: #{tpu_custom_call.1} parent=1 // pred_region
      %35 = dma.done [#allocation6], 128
    $region17: #{tpu_custom_call.1} parent=1 // pred_fallthru
      _
    %v36 = vld [vmem:[#allocation2] sm:$0xff]
    %v37 = vld [vmem:[#allocation5] sm:$0xff]
    %v38 = vadd.f32 %v36, %v37
    %39 = vst [vmem:[#allocation7] sm:$0xff] %v38
    // Predicated region
    $region18: #{tpu_custom_call.1} parent=1 // pred_check
      _
    $region19: #{tpu_custom_call.1} parent=1 // pred_check_branch
      %41 = sbr.rel (0) target = $region21
    $region20: #{tpu_custom_call.1} parent=1 // pred_region
      %s43 = ssub.s32 128, 128
      %44 = vsyncadd [#allocation4], %s43
      %s46 = sshll.u32 [#allocation7], 4
      %s47 = int_to_ptr.vmem [resolvable:$true] %s46
      %49 = dma.vmem_to_hbm [thread:$0]  %s47, 128, %s2, [#allocation4]
    $region21: #{tpu_custom_call.1} parent=1 // pred_fallthru
      _
    // Predicated region
    $region22: #{tpu_custom_call.1} parent=1 // pred_check
      _
    $region23: #{tpu_custom_call.1} parent=1 // pred_check_branch
      %51 = sbr.rel (0) target = $region25
    $region24: #{tpu_custom_call.1} parent=1 // pred_region
      %52 = dma.done [#allocation4], 128
    $region25: #{tpu_custom_call.1} parent=1 // pred_fallthru
      _
    %53 = vsyncpa [#allocation3], 1
    %54 = vsyncpa [#allocation6], 1
    %55 = vsyncpa [#allocation4], 1

// kernel: _residual_ffn_call.1
$region0: #{_residual_ffn_call.1}
  #allocation0 [shape = 'u32[]', space=smem, size = 0x4, offset = 0x4, fixed_abs, tag = 'smem constant byte address 0x4 - core index']
  #allocation1 [shape = 'u32[144,128]{1,0:T(1,128)}', space=vmem, size = 0x12000, scoped, tag = 'internal scratch']
  %s0 = inlined_call_operand.hbm [shape: f32[16,128], index: 0, kind: input, shape index: {}]
  %s1 = inlined_call_operand.hbm [shape: bf16[128,256], index: 1, kind: input, shape index: {}]
  %s2 = inlined_call_operand.vmem [shape: f32[1,256], index: 2, kind: input, shape index: {}]
  %s3 = inlined_call_operand.hbm [shape: bf16[256,128], index: 3, kind: input, shape index: {}]
  %s4 = inlined_call_operand.vmem [shape: f32[1,128], index: 4, kind: input, shape index: {}]
  %s5 = inlined_call_operand.hbm [shape: f32[16,128], index: 5, kind: output, shape index: {}]
  %s6 = sld [smem:[#allocation0]]
  $region42: #{_residual_ffn_call.1} parent=0
    _
  %s8 = ssub.s32 1, %s6
  %s9 = scalar_select 0, %s8, %s6
  $region1: #{_residual_ffn_call.1} parent=0
    #allocation2 [shape = 'u8[8192]{0}', space=vmem, size = 0x2000, scoped, tag = 'input window, operand 0, single buffered']
    #allocation3 [shape = 's32[1]{0}', space=sflag, size = 0x4, scoped, tag = 'scoped memory for _residual_ffn_call.1']
    #allocation4 [shape = 's32[1]{0}', space=sflag, size = 0x4, scoped, tag = 'scoped memory for _residual_ffn_call.1']
    #allocation5 [shape = 'u8[65536]{0}', space=vmem, size = 0x10000, scoped, tag = 'input window, operand 1, single buffered']
    #allocation6 [shape = 's32[1]{0}', space=sflag, size = 0x4, scoped, tag = 'scoped memory for _residual_ffn_call.1']
    #allocation7 [shape = 'u8[65536]{0}', space=vmem, size = 0x10000, scoped, tag = 'input window, operand 3, single buffered']
    #allocation8 [shape = 'u8[8192]{0}', space=vmem, size = 0x2000, scoped, tag = 'output window, operand 0, single buffered']
    %10 = vsyncpa [#allocation3], 0
    %11 = vsyncpa [#allocation6], 0
    %12 = vsyncpa [#allocation4], 0
    // Predicated region
    $region2: #{_residual_ffn_call.1} parent=1 // pred_check
      _
    $region3: #{_residual_ffn_call.1} parent=1 // pred_check_branch
      %14 = sbr.rel (0) target = $region5
    $region4: #{_residual_ffn_call.1} parent=1 // pred_region
      %s16 = ssub.s32 256, 256
      %17 = vsyncadd [#allocation3], %s16
      %s18 = sshll.u32 [#allocation2], 4
      %s19 = int_to_ptr.vmem [resolvable:$true] %s18
      %24 = dma.hbm_to_vmem [thread:$0]  %s0, 256, %s19, [#allocation3], 128, 128, 8
    $region5: #{_residual_ffn_call.1} parent=1 // pred_fallthru
      _
    // Predicated region
    $region6: #{_residual_ffn_call.1} parent=1 // pred_check
      _
    $region7: #{_residual_ffn_call.1} parent=1 // pred_check_branch
      %26 = sbr.rel (0) target = $region9
    $region8: #{_residual_ffn_call.1} parent=1 // pred_region
      %s28 = ssub.s32 2048, 2048
      %29 = vsyncadd [#allocation6], %s28
      %s30 = sshll.u32 [#allocation5], 4
      %s31 = int_to_ptr.vmem [resolvable:$true] %s30
      %36 = dma.hbm_to_vmem [thread:$0]  %s1, 2048, %s31, [#allocation6], 128, 128, 8
    $region9: #{_residual_ffn_call.1} parent=1 // pred_fallthru
      _
    // Predicated region
    $region10: #{_residual_ffn_call.1} parent=1 // pred_check
      _
    $region11: #{_residual_ffn_call.1} parent=1 // pred_check_branch
      %38 = sbr.rel (0) target = $region13
    $region12: #{_residual_ffn_call.1} parent=1 // pred_region
      _
    $region13: #{_residual_ffn_call.1} parent=1 // pred_fallthru
      _
    // Predicated region
    $region14: #{_residual_ffn_call.1} parent=1 // pred_check
      _
    $region15: #{_residual_ffn_call.1} parent=1 // pred_check_branch
      %40 = sbr.rel (0) target = $region17
    $region16: #{_residual_ffn_call.1} parent=1 // pred_region
      %s42 = ssub.s32 2048, 2048
      %43 = vsyncadd [#allocation6], %s42
      %s44 = sshll.u32 [#allocation7], 4
      %s45 = int_to_ptr.vmem [resolvable:$true] %s44
      %50 = dma.hbm_to_vmem [thread:$0]  %s3, 2048, %s45, [#allocation6], 64, 64, 4
    $region17: #{_residual_ffn_call.1} parent=1 // pred_fallthru
      _
    // Predicated region
    $region18: #{_residual_ffn_call.1} parent=1 // pred_check
      _
    $region19: #{_residual_ffn_call.1} parent=1 // pred_check_branch
      %52 = sbr.rel (0) target = $region21
    $region20: #{_residual_ffn_call.1} parent=1 // pred_region
      _
    $region21: #{_residual_ffn_call.1} parent=1 // pred_fallthru
      _
    // Predicated region
    $region22: #{_residual_ffn_call.1} parent=1 // pred_check
      _
    $region23: #{_residual_ffn_call.1} parent=1 // pred_check_branch
      %54 = sbr.rel (0) target = $region25
    $region24: #{_residual_ffn_call.1} parent=1 // pred_region
      %55 = dma.done [#allocation3], 256
    $region25: #{_residual_ffn_call.1} parent=1 // pred_fallthru
      _
    // Predicated region
    $region26: #{_residual_ffn_call.1} parent=1 // pred_check
      _
    $region27: #{_residual_ffn_call.1} parent=1 // pred_check_branch
      %57 = sbr.rel (0) target = $region29
    $region28: #{_residual_ffn_call.1} parent=1 // pred_region
      %58 = dma.done [#allocation6], 2048
    $region29: #{_residual_ffn_call.1} parent=1 // pred_fallthru
      _
    // Predicated region
    $region30: #{_residual_ffn_call.1} parent=1 // pred_check
      _
    $region31: #{_residual_ffn_call.1} parent=1 // pred_check_branch
      %60 = sbr.rel (0) target = $region33
    $region32: #{_residual_ffn_call.1} parent=1 // pred_region
      %61 = dma.done [#allocation6], 2048
    $region33: #{_residual_ffn_call.1} parent=1 // pred_fallthru
      _
    %v67 = vld [vmem:[#allocation2] sm:$0xff]
    %v68 = vld [vmem:[#allocation2 + $0x8] sm:$0xff]
    %v69 = vpack.c.bf16 %v68, %v67
    %v70 = vld [vmem:[#allocation5] sm:$0xff]
    %v71 = vld [vmem:[#allocation5 + $0x8] sm:$0xff]
    %v72 = vld [vmem:[#allocation5 + $0x10] sm:$0xff]
    %v73 = vld [vmem:[#allocation5 + $0x18] sm:$0xff]
    %v74 = vld [vmem:[#allocation5 + $0x20] sm:$0xff]
    %v75 = vld [vmem:[#allocation5 + $0x28] sm:$0xff]
    %v76 = vld [vmem:[#allocation5 + $0x30] sm:$0xff]
    %v77 = vld [vmem:[#allocation5 + $0x38] sm:$0xff]
    %v78 = vld [vmem:[#allocation5 + $0x40] sm:$0xff]
    %v79 = vld [vmem:[#allocation5 + $0x48] sm:$0xff]
    %v80 = vld [vmem:[#allocation5 + $0x50] sm:$0xff]
    %v81 = vld [vmem:[#allocation5 + $0x58] sm:$0xff]
    %v82 = vld [vmem:[#allocation5 + $0x60] sm:$0xff]
    %v83 = vld [vmem:[#allocation5 + $0x68] sm:$0xff]
    %v84 = vld [vmem:[#allocation5 + $0x70] sm:$0xff]
    %v85 = vld [vmem:[#allocation5 + $0x78] sm:$0xff]
    %v102 = vunpack.c.l.b16 %v70
    %v103 = vunpack.c.h.b16 %v70
    %v104 = vunpack.c.l.b16 %v71
    %v105 = vunpack.c.h.b16 %v71
    %v106 = vunpack.c.l.b16 %v72
    %v107 = vunpack.c.h.b16 %v72
    %v108 = vunpack.c.l.b16 %v73
    %v109 = vunpack.c.h.b16 %v73
    %v110 = vunpack.c.l.b16 %v74
    %v111 = vunpack.c.h.b16 %v74
    %v112 = vunpack.c.l.b16 %v75
    %v113 = vunpack.c.h.b16 %v75
    %v114 = vunpack.c.l.b16 %v76
    %v115 = vunpack.c.h.b16 %v76
    %v116 = vunpack.c.l.b16 %v77
    %v117 = vunpack.c.h.b16 %v77
    %v118 = vunpack.c.l.b16 %v78
    %v119 = vunpack.c.h.b16 %v78
    %v120 = vunpack.c.l.b16 %v79
    %v121 = vunpack.c.h.b16 %v79
    %v122 = vunpack.c.l.b16 %v80
    %v123 = vunpack.c.h.b16 %v80
    %v124 = vunpack.c.l.b16 %v81
    %v125 = vunpack.c.h.b16 %v81
    %v126 = vunpack.c.l.b16 %v82
    %v127 = vunpack.c.h.b16 %v82
    %v128 = vunpack.c.l.b16 %v83
    %v129 = vunpack.c.h.b16 %v83
    %v130 = vunpack.c.l.b16 %v84
    %v131 = vunpack.c.h.b16 %v84
    %v132 = vunpack.c.l.b16 %v85
    %v133 = vunpack.c.h.b16 %v85
    %v134 = vpack.c.b16 %v104, %v102
    %v135 = vpack.c.b16 %v105, %v103
    %v136 = vpack.c.b16 %v108, %v106
    %v137 = vpack.c.b16 %v109, %v107
    %v138 = vpack.c.b16 %v112, %v110
    %v139 = vpack.c.b16 %v113, %v111
    %v140 = vpack.c.b16 %v116, %v114
    %v141 = vpack.c.b16 %v117, %v115
    %v142 = vpack.c.b16 %v120, %v118
    %v143 = vpack.c.b16 %v121, %v119
    %v144 = vpack.c.b16 %v124, %v122
    %v145 = vpack.c.b16 %v125, %v123
    %v146 = vpack.c.b16 %v128, %v126
    %v147 = vpack.c.b16 %v129, %v127
    %v148 = vpack.c.b16 %v132, %v130
    %v149 = vpack.c.b16 %v133, %v131
    %166 = vmatprep.subr.bf16.mxu0 %v149
    %167 = vmatpush1.bf16.msra.mxu0 %v148
    %168 = vmatprep.subr.bf16.mxu0 %v147
    %169 = vmatpush1.bf16.msra.mxu0 %v146
    %170 = vmatprep.subr.bf16.mxu0 %v145
    %171 = vmatpush1.bf16.msra.mxu0 %v144
    %172 = vmatprep.subr.bf16.mxu0 %v143
    %173 = vmatpush1.bf16.msra.mxu0 %v142
    %174 = vmatprep.subr.bf16.mxu0 %v141
    %175 = vmatpush1.bf16.msra.mxu0 %v140
    %176 = vmatprep.subr.bf16.mxu0 %v139
    %177 = vmatpush1.bf16.msra.mxu0 %v138
    %178 = vmatprep.subr.bf16.mxu0 %v137
    %179 = vmatpush1.bf16.msra.mxu0 %v136
    %180 = vmatprep.subr.bf16.mxu0 %v135
    %181 = vmatpush1.bf16.msra.mxu0 %v134
    %182 = vmatprep.subr.bf16.mxu0 0
    %183 = vmatpush2.bf16.msra.mxu0 0
    %184 = vmatprep.subr.bf16.mxu0 0
    %185 = vmatpush2.bf16.msra.mxu0 0
    %186 = vmatprep.subr.bf16.mxu0 0
    %187 = vmatpush2.bf16.msra.mxu0 0
    %188 = vmatprep.subr.bf16.mxu0 0
    %189 = vmatpush2.bf16.msra.mxu0 0
    %190 = vmatprep.subr.bf16.mxu0 0
    %191 = vmatpush2.bf16.msra.mxu0 0
    %192 = vmatprep.subr.bf16.mxu0 0
    %193 = vmatpush2.bf16.msra.mxu0 0
    %194 = vmatprep.subr.bf16.mxu0 0
    %195 = vmatpush2.bf16.msra.mxu0 0
    %196 = vmatprep.subr.bf16.mxu0 0
    %197 = vmatpush2.bf16.msra.mxu0 0
    %198 = vmatprep.mubr.bf16.mxu0 0
    %199 = vmatmul.mubr.bf16.gmra.mxu0 %v69
    %v200 = vpop.f32.mrf.mxu0
    %v201 = vadd.f32 0.0, %v200
    %v202 = vpop.f32.mrf.mxu0
    %v203 = vadd.f32 0.0, %v202
    %v204 = vpop.f32.mrf.mxu0
    %v205 = vadd.f32 0.0, %v204
    %v206 = vpop.f32.mrf.mxu0
    %v207 = vadd.f32 0.0, %v206
    %208 = vdwg.mxu0
    %v209 = vpack.c.bf16 %v205, %v201
    %v210 = vpack.c.bf16 %v207, %v203
    %v211 = vld [vmem:[%s2] sm:$0x3]
    %v213 = vlaneseq
    %v214 = vshrl.u32 %v213, 7
    %v215 = vsub.s32 0, %v214
    %v216 = vrot.slane %v211, %v215
    %v217 = vlaneseq
    %v218 = vshrl.u32 %v217, 7
    %v219 = vsub.s32 1, %v218
    %v220 = vrot.slane %v211, %v219
    %v223 = vpack.c.bf16 %v216, %v216
    %v224 = vpack.c.bf16 %v220, %v220
    %v226 = vpack.i.b16 %v223, %v223
    %v228 = vlaneseq
    %v229 = vshrl.u32 %v228, 7
    %v230 = vsub.s32 0, %v229
    %v231 = vrot.slane %v226, %v230
    %v233 = vpack.i.b16 %v224, %v224
    %v235 = vlaneseq
    %v236 = vshrl.u32 %v235, 7
    %v237 = vsub.s32 0, %v236
    %v238 = vrot.slane %v233, %v237
    %v239 = vadd.bf16 %v209, %v231
    %v240 = vadd.bf16 %v210, %v238
    %v241 = vmul.bf16 %v239, %v239
    %v242 = vmul.bf16 %v240, %v240
    %v243 = vmul.bf16 %v239, %v241
    %v244 = vmul.bf16 %v240, %v242
    %v245 = vmul.bf16 %v243, 1027030327
    %v246 = vmul.bf16 %v244, 1027030327
    %v247 = vadd.bf16 %v239, %v245
    %v248 = vadd.bf16 %v240, %v246
    %v249 = vmul.bf16 %v247, 1061961548
    %v250 = vmul.bf16 %v248, 1061961548
    %v251 = vtanh.bf16.pop %v249
    %v252 = vtanh.bf16.pop %v250
    %v253 = vadd.bf16 %v251, 1065369472
    %v254 = vadd.bf16 %v252, 1065369472
    %v255 = vmul.bf16 %v253, 1056980736
    %v256 = vmul.bf16 %v254, 1056980736
    %v257 = vmul.bf16 %v239, %v255
    %v258 = vmul.bf16 %v240, %v256
    %v259 = vld [vmem:[#allocation7] sm:$0xf]
    %v260 = vld [vmem:[#allocation7 + $0x4] sm:$0xf]
    %v261 = vld [vmem:[#allocation7 + $0x8] sm:$0xf]
    %v262 = vld [vmem:[#allocation7 + $0xc] sm:$0xf]
    %v263 = vld [vmem:[#allocation7 + $0x10] sm:$0xf]
    %v264 = vld [vmem:[#allocation7 + $0x14] sm:$0xf]
    %v265 = vld [vmem:[#allocation7 + $0x18] sm:$0xf]
    %v266 = vld [vmem:[#allocation7 + $0x1c] sm:$0xf]
    %v267 = vld [vmem:[#allocation7 + $0x20] sm:$0xf]
    %v268 = vld [vmem:[#allocation7 + $0x24] sm:$0xf]
    %v269 = vld [vmem:[#allocation7 + $0x28] sm:$0xf]
    %v270 = vld [vmem:[#allocation7 + $0x2c] sm:$0xf]
    %v271 = vld [vmem:[#allocation7 + $0x30] sm:$0xf]
    %v272 = vld [vmem:[#allocation7 + $0x34] sm:$0xf]
    %v273 = vld [vmem:[#allocation7 + $0x38] sm:$0xf]
    %v274 = vld [vmem:[#allocation7 + $0x3c] sm:$0xf]
    %v275 = vld [vmem:[#allocation7 + $0x40] sm:$0xf]
    %v276 = vld [vmem:[#allocation7 + $0x44] sm:$0xf]
    %v277 = vld [vmem:[#allocation7 + $0x48] sm:$0xf]
    %v278 = vld [vmem:[#allocation7 + $0x4c] sm:$0xf]
    %v279 = vld [vmem:[#allocation7 + $0x50] sm:$0xf]
    %v280 = vld [vmem:[#allocation7 + $0x54] sm:$0xf]
    %v281 = vld [vmem:[#allocation7 + $0x58] sm:$0xf]
    %v282 = vld [vmem:[#allocation7 + $0x5c] sm:$0xf]
    %v283 = vld [vmem:[#allocation7 + $0x60] sm:$0xf]
    %v284 = vld [vmem:[#allocation7 + $0x64] sm:$0xf]
    %v285 = vld [vmem:[#allocation7 + $0x68] sm:$0xf]
    %v286 = vld [vmem:[#allocation7 + $0x6c] sm:$0xf]
    %v287 = vld [vmem:[#allocation7 + $0x70] sm:$0xf]
    %v288 = vld [vmem:[#allocation7 + $0x74] sm:$0xf]
    %v289 = vld [vmem:[#allocation7 + $0x78] sm:$0xf]
    %v290 = vld [vmem:[#allocation7 + $0x7c] sm:$0xf]
    %v291 = vld [vmem:[%s4] sm:$0x1]
    %v293 = vlaneseq
    %v294 = vshrl.u32 %v293, 7
    %v295 = vsub.s32 0, %v294
    %v296 = vrot.slane %v291, %v295
    %v330 = vunpack.c.l.b16 %v259
    %v331 = vunpack.c.l.b16 %v260
    %v332 = vunpack.c.l.b16 %v261
    %v333 = vunpack.c.l.b16 %v262
    %v334 = vunpack.c.l.b16 %v263
    %v335 = vunpack.c.l.b16 %v264
    %v336 = vunpack.c.l.b16 %v265
    %v337 = vunpack.c.l.b16 %v266
    %v338 = vunpack.c.l.b16 %v267
    %v339 = vunpack.c.l.b16 %v268
    %v340 = vunpack.c.l.b16 %v269
    %v341 = vunpack.c.l.b16 %v270
    %v342 = vunpack.c.l.b16 %v271
    %v343 = vunpack.c.l.b16 %v272
    %v344 = vunpack.c.l.b16 %v273
    %v345 = vunpack.c.l.b16 %v274
    %v346 = vunpack.c.l.b16 %v275
    %v347 = vunpack.c.l.b16 %v276
    %v348 = vunpack.c.l.b16 %v277
    %v349 = vunpack.c.l.b16 %v278
    %v350 = vunpack.c.l.b16 %v279
    %v351 = vunpack.c.l.b16 %v280
    %v352 = vunpack.c.l.b16 %v281
    %v353 = vunpack.c.l.b16 %v282
    %v354 = vunpack.c.l.b16 %v283
    %v355 = vunpack.c.l.b16 %v284
    %v356 = vunpack.c.l.b16 %v285
    %v357 = vunpack.c.l.b16 %v286
    %v358 = vunpack.c.l.b16 %v287
    %v359 = vunpack.c.l.b16 %v288
    %v360 = vunpack.c.l.b16 %v289
    %v361 = vunpack.c.l.b16 %v290
    %v362 = vpack.c.b16 %v331, %v330
    %v363 = vpack.c.b16 %v333, %v332
    %v364 = vpack.c.b16 %v335, %v334
    %v365 = vpack.c.b16 %v337, %v336
    %v366 = vpack.c.b16 %v339, %v338
    %v367 = vpack.c.b16 %v341, %v340
    %v368 = vpack.c.b16 %v343, %v342
    %v369 = vpack.c.b16 %v345, %v344
    %v370 = vpack.c.b16 %v347, %v346
    %v371 = vpack.c.b16 %v349, %v348
    %v372 = vpack.c.b16 %v351, %v350
    %v373 = vpack.c.b16 %v353, %v352
    %v374 = vpack.c.b16 %v355, %v354
    %v375 = vpack.c.b16 %v357, %v356
    %v376 = vpack.c.b16 %v359, %v358
    %v377 = vpack.c.b16 %v361, %v360
    %394 = vmatprep.subr.bf16.mxu0 0
    %395 = vmatpush1.bf16.msra.mxu0 %v369
    %396 = vmatprep.subr.bf16.mxu0 0
    %397 = vmatpush1.bf16.msra.mxu0 %v368
    %398 = vmatprep.subr.bf16.mxu0 0
    %399 = vmatpush1.bf16.msra.mxu0 %v367
    %400 = vmatprep.subr.bf16.mxu0 0
    %401 = vmatpush1.bf16.msra.mxu0 %v366
    %402 = vmatprep.subr.bf16.mxu0 0
    %403 = vmatpush1.bf16.msra.mxu0 %v365
    %404 = vmatprep.subr.bf16.mxu0 0
    %405 = vmatpush1.bf16.msra.mxu0 %v364
    %406 = vmatprep.subr.bf16.mxu0 0
    %407 = vmatpush1.bf16.msra.mxu0 %v363
    %408 = vmatprep.subr.bf16.mxu0 0
    %409 = vmatpush1.bf16.msra.mxu0 %v362
    %410 = vmatprep.subr.bf16.mxu0 0
    %411 = vmatpush2.bf16.msra.mxu0 %v377
    %412 = vmatprep.subr.bf16.mxu0 0
    %413 = vmatpush2.bf16.msra.mxu0 %v376
    %414 = vmatprep.subr.bf16.mxu0 0
    %415 = vmatpush2.bf16.msra.mxu0 %v375
    %416 = vmatprep.subr.bf16.mxu0 0
    %417 = vmatpush2.bf16.msra.mxu0 %v374
    %418 = vmatprep.subr.bf16.mxu0 0
    %419 = vmatpush2.bf16.msra.mxu0 %v373
    %420 = vmatprep.subr.bf16.mxu0 0
    %421 = vmatpush2.bf16.msra.mxu0 %v372
    %422 = vmatprep.subr.bf16.mxu0 0
    %423 = vmatpush2.bf16.msra.mxu0 %v371
    %424 = vmatprep.subr.bf16.mxu0 0
    %425 = vmatpush2.bf16.msra.mxu0 %v370
    %426 = vmatprep.mubr.bf16.mxu0 %v258
    %427 = vmatmul.mubr.bf16.gmra.mxu0 %v257
    %v428 = vpop.f32.mrf.mxu0
    %v429 = vadd.f32 %v296, %v428
    %v430 = vpop.f32.mrf.mxu0
    %v431 = vpop.f32.mrf.mxu0
    %v432 = vadd.f32 %v296, %v431
    %v433 = vpop.f32.mrf.mxu0
    %434 = vdwg.mxu0
    %v435 = vadd.f32 %v429, %v67
    %v436 = vadd.f32 %v432, %v68
    %437 = vst [vmem:[#allocation8] sm:$0xff] %v435
    %438 = vst [vmem:[#allocation8 + $0x8] sm:$0xff] %v436
    // Predicated region
    $region34: #{_residual_ffn_call.1} parent=1 // pred_check
      _
    $region35: #{_residual_ffn_call.1} parent=1 // pred_check_branch
      %440 = sbr.rel (0) target = $region37
    $region36: #{_residual_ffn_call.1} parent=1 // pred_region
      %s442 = ssub.s32 256, 256
      %443 = vsyncadd [#allocation4], %s442
      %s444 = sshll.u32 [#allocation8], 4
      %s445 = int_to_ptr.vmem [resolvable:$true] %s444
      %450 = dma.vmem_to_hbm [thread:$0]  %s445, 256, %s5, [#allocation4], 128, 128, 8
    $region37: #{_residual_ffn_call.1} parent=1 // pred_fallthru
      _
    // Predicated region
    $region38: #{_residual_ffn_call.1} parent=1 // pred_check
      _
    $region39: #{_residual_ffn_call.1} parent=1 // pred_check_branch
      %452 = sbr.rel (0) target = $region41
    $region40: #{_residual_ffn_call.1} parent=1 // pred_region
      %453 = dma.done [#allocation4], 256
    $region41: #{_residual_ffn_call.1} parent=1 // pred_fallthru
      _
    %454 = vsyncpa [#allocation3], 1
    %455 = vsyncpa [#allocation6], 1
    %456 = vsyncpa [#allocation4], 1

</llo_original>
